<compile_context>
chip_gen: v6e
topology: v6e:2x2x1
jax: 0.10.0
libtpu: 0.0.40
codegen_flags: <defaults>
</compile_context>

<pallas_src>
import jax
import jax.numpy as jnp
from jax import lax
from jax.experimental import pallas as pl
from jax.experimental.pallas import tpu as pltpu


# ----------------------------- Pallas kernel --------------------------------
def _elu_halves(t):
    """Shared-exponential concat-ELU halves for f32 input t (rows x lanes).

    Returns (elu(t), elu(-t)) as bf16.  exp is evaluated once over |t| instead
    of over the doubled tensor, halving the transcendental count on the EUP.
    """
    e = jnp.exp(-jnp.abs(t)) - 1.0           # == elu(t) for t<=0, elu(-t) for t>=0
    pos = t > 0
    h_pos = jnp.where(pos, t, e)             # elu(t)
    h_neg = jnp.where(pos, e, -t)            # elu(-t)
    return h_pos.astype(jnp.bfloat16), h_neg.astype(jnp.bfloat16)


def _gated_resnet_kernel(x_ref, a_ref, w1s_ref, b1s_ref, w2t_ref, b2_ref, o_ref):
    """Fused gated_resnet block, pixels-last (channels x pixels) layout.

    x_ref  : (Nb, C, T)  og_x tile (bf16 in HBM)
    a_ref  : (Nb, C, T)  auxiliary stream tile (skip_connection = 1)
    w1s_ref: (C, 4C)     [conv_input.W^T | nin_skip.W^T] stacked, bf16
    b1s_ref: (C, 1)      conv_input.bias + nin_skip.bias, f32
    w2t_ref: (2C, 2C)    conv_out weight transposed to (out, in), bf16
    b2_ref : (2C, 1)     conv_out bias, f32
    o_ref  : (Nb, C, T)
    """
    C = x_ref.shape[1]
    w1s = w1s_ref[...]
    b1s = b1s_ref[...]
    w2t = w2t_ref[...]
    b2 = b2_ref[...]

    def one_image(n):
        xf = x_ref[n].astype(jnp.float32)                              # (C, T)
        af = a_ref[n].astype(jnp.float32)                              # (C, T)
        x1, x2 = _elu_halves(xf)
        a1, a2 = _elu_halves(af)
        # Fused conv_input(concat_elu(x)) + nin_skip(concat_elu(a)):
        # single 4C-deep contraction (K = 128 for C = 32 fills a lane tile).
        u = jnp.concatenate([x1, x2, a1, a2], axis=0)                  # (4C, T) bf16
        h = jnp.dot(w1s, u, preferred_element_type=jnp.float32) + b1s  # (C, T) f32
        # x = concat_elu(x); Dropout2d in eval mode == identity.
        # TODO(synk): Dropout2d training mode (per-channel masking) not implemented.
        h1, h2 = _elu_halves(h)
        v = jnp.concatenate([h1, h2], axis=0)                          # (2C, T) bf16
        z = jnp.dot(w2t, v, preferred_element_type=jnp.float32) + b2   # (2C, T) f32
        out = xf + z[:C] * jax.nn.sigmoid(z[C:])
        o_ref[n] = out.astype(o_ref.dtype)

    nb = x_ref.shape[0]
    if nb == 1:
        one_image(0)
    else:
        # fori_loop (not a Python unroll) keeps only one image's intermediates
        # live at a time; per-iteration work is large so loop overhead is noise.
        def body(i, carry):
            one_image(i)
            return carry
        lax.fori_loop(0, nb, body, 0)


# ------------------------------ wrapper --------------------------------------
def _round_up(x, m):
    return ((x + m - 1) // m) * m


def _choose_tiling(N, C, HW, *, max_t, target_step_bytes, min_step_bytes):
    """Pick (pixel_tile, padded_HW, n_pixel_tiles, batch_block)."""
    hw128 = _round_up(HW, 128)
    # Keep per-image in-kernel intermediates bounded (~a few MB) regardless of C.
    max_t_eff = max(128, min(max_t, ((131072 // max(C, 1)) // 128) * 128))
    if hw128 <= max_t_eff:
        # Small/medium pixel count: do NOT split the pixel axis (per-step
        # overhead dominates tiny tiles).
        t = hw128
        n_tiles = 1
    else:
        n_tiles = -(-hw128 // max_t_eff)
        t = _round_up(-(-hw128 // n_tiles), 128)
    hw_pad = t * n_tiles

    # Batch blocking: amortize the fixed per-grid-step cost when HW is small.
    per_elem_bytes = C * t * 2  # bf16 tile per image per streamed array
    divisors = [d for d in range(1, N + 1) if N % d == 0]
    fits = [d for d in divisors if d * per_elem_bytes <= target_step_bytes] or [1]
    nb = max(fits)
    # v7x megacore: prefer >= 2 grid steps, but only when each step still
    # moves a healthy amount of data — never degrade to tiny tiles to split.
    if (N // nb) * n_tiles < 2:
        alt = [d for d in fits
               if (N // d) * n_tiles >= 2 and d * per_elem_bytes >= min_step_bytes]
        if alt:
            nb = max(alt)
    return t, hw_pad, n_tiles, nb


def gated_resnet_pallas(og_x, a, params, *,
                        max_pixel_tile=4096,
                        target_step_bytes=1 << 20,
                        min_step_bytes=128 << 10,
                        vmem_limit_bytes=32 * 1024 * 1024):
    """og_x, a: (N, C, H, W), any float dtype (bf16 recommended for HBM traffic).

    params: effective (weight-normed) weights in (in, out) layout:
      w1 (2C, C), b1 (C,), ws (2C, C), bs (C,), w2 (2C, 2C), b2 (2C,).
    Returns (N, C, H, W) in og_x.dtype.
    """
    N, C, H, W = og_x.shape
    HW = H * W

    # Pack weights for the pixels-last kernel (tiny one-time host work):
    #   h = W1s @ [ce(x); ce(a)] + (b1 + bs);   z = W2t @ ce(h) + b2
    w1s = jnp.concatenate([params["w1"].T, params["ws"].T],
                          axis=1).astype(jnp.bfloat16)                  # (C, 4C)
    b1s = (params["b1"] + params["bs"]).astype(jnp.float32).reshape(C, 1)
    w2t = params["w2"].T.astype(jnp.bfloat16)                           # (2C, 2C)
    b2 = params["b2"].astype(jnp.float32).reshape(2 * C, 1)

    # NCHW -> (N, C, H*W): free row-major reshape, no transpose / extra HBM pass.
    x3 = og_x.reshape(N, C, HW)
    a3 = a.reshape(N, C, HW)

    t, hw_pad, n_tiles, nb = _choose_tiling(
        N, C, HW, max_t=max_pixel_tile,
        target_step_bytes=target_step_bytes, min_step_bytes=min_step_bytes)

    if hw_pad != HW:
        pad = hw_pad - HW
        # NOTE: padded columns come out of the kernel non-zero (bias/gating);
        # they are sliced off below and must never be consumed directly.
        x3 = jnp.pad(x3, ((0, 0), (0, 0), (0, pad)))
        a3 = jnp.pad(a3, ((0, 0), (0, 0), (0, pad)))

    full2d = lambda n, p: (0, 0)
    out3 = pl.pallas_call(
        _gated_resnet_kernel,
        out_shape=jax.ShapeDtypeStruct((N, C, hw_pad), og_x.dtype),
        grid=(N // nb, n_tiles),
        in_specs=[
            pl.BlockSpec((nb, C, t), lambda n, p: (n, 0, p)),   # x tile
            pl.BlockSpec((nb, C, t), lambda n, p: (n, 0, p)),   # a tile
            pl.BlockSpec((C, 4 * C), full2d),                   # w1s (resident)
            pl.BlockSpec((C, 1), full2d),                       # b1s
            pl.BlockSpec((2 * C, 2 * C), full2d),               # w2t
            pl.BlockSpec((2 * C, 1), full2d),                   # b2
        ],
        out_specs=pl.BlockSpec((nb, C, t), lambda n, p: (n, 0, p)),
        compiler_params=pltpu.CompilerParams(
            dimension_semantics=("parallel", "parallel"),
            vmem_limit_bytes=vmem_limit_bytes),
    )(x3, a3, w1s, b1s, w2t, b2)

    if hw_pad != HW:
        out3 = out3[:, :, :HW]
    return out3.reshape(N, C, H, W)


# --------------------------- parameter setup ---------------------------------
def _weight_norm(v, g):
    """PyTorch weight_norm(dim=0) for Linear weight v of shape (out, in)."""
    norm = jnp.sqrt(jnp.sum(v * v, axis=1, keepdims=True))
    return g.reshape(-1, 1) * v / norm


def make_params(key, num_filters):
    C = num_filters
    ks = jax.random.split(key, 9)
    # conv_input == nin(2C, C): Linear weight (C, 2C)
    v1 = jax.random.normal(ks[0], (C, 2 * C), jnp.float32) * 0.1
    g1 = 1.0 + 0.1 * jax.random.normal(ks[1], (C,), jnp.float32)
    b1 = 0.1 * jax.random.normal(ks[2], (C,), jnp.float32)
    # nin_skip == nin(2C, C)  (skip_connection = 1)
    vs = jax.random.normal(ks[3], (C, 2 * C), jnp.float32) * 0.1
    gs = 1.0 + 0.1 * jax.random.normal(ks[4], (C,), jnp.float32)
    bs = 0.1 * jax.random.normal(ks[5], (C,), jnp.float32)
    # conv_out == nin(2C, 2C): Linear weight (2C, 2C)
    v2 = jax.random.normal(ks[6], (2 * C, 2 * C), jnp.float32) * 0.1
    g2 = 1.0 + 0.1 * jax.random.normal(ks[7], (2 * C,), jnp.float32)
    b2 = 0.1 * jax.random.normal(ks[8], (2 * C,), jnp.float32)

    # Effective (weight-normed) weights, transposed to (in, out).
    return dict(
        w1=_weight_norm(v1, g1).T,   # (2C, C)
        b1=b1,
        ws=_weight_norm(vs, gs).T,   # (2C, C)
        bs=bs,
        w2=_weight_norm(v2, g2).T,   # (2C, 2C)
        b2=b2,
    )


# ----------------------------- pure-JAX reference -----------------------------
def gated_resnet_ref(og_x, a, params, *, match_kernel_bf16=True):
    """NCHW reference in f32.  With match_kernel_bf16=True the matmul operands
    are rounded to bf16 (like the kernel's MXU inputs) for a tight comparison."""
    f32 = jnp.float32
    x = og_x.astype(f32)
    aa = a.astype(f32)

    def concat_elu(t):  # channel axis = 1
        t2 = jnp.concatenate([t, -t], axis=1)
        return jnp.where(t2 > 0, t2, jnp.exp(jnp.minimum(t2, 0.0)) - 1.0)

    def nin(t, w, b):   # t: NCHW f32, w: (in, out) f32
        n, cin, h, wd = t.shape
        tm = jnp.transpose(t, (0, 2, 3, 1)).reshape(-1, cin)
        wm = w
        if match_kernel_bf16:
            tm = tm.astype(jnp.bfloat16)
            wm = wm.astype(jnp.bfloat16)
        o = jnp.dot(tm, wm, preferred_element_type=f32) + b.astype(f32)
        return jnp.transpose(o.reshape(n, h, wd, -1), (0, 3, 1, 2))

    h = nin(concat_elu(x), params["w1"], params["b1"])
    h = h + nin(concat_elu(aa), params["ws"], params["bs"])
    v = concat_elu(h)
    z = nin(v, params["w2"], params["b2"])
    c = og_x.shape[1]
    ap, bp = z[:, :c], z[:, c:]
    return x + ap * jax.nn.sigmoid(bp)


# --------------------------------- main ---------------------------------------
if __name__ == "__main__":
    num_filters = 32
    N, H, W = 2, 16, 16

    key = jax.random.PRNGKey(0)
    k_x, k_a, k_p = jax.random.split(key, 3)
    # bf16 activations in HBM (mem-bound kernel); all math inside is f32.
    og_x = jax.random.normal(k_x, (N, num_filters, H, W),
                             jnp.float32).astype(jnp.bfloat16)
    a_in = jax.random.normal(k_a, (N, num_filters, H, W),
                             jnp.float32).astype(jnp.bfloat16)
    params = make_params(k_p, num_filters)

    out = gated_resnet_pallas(og_x, a_in, params)
    out = jax.block_until_ready(out)

    ref = gated_resnet_ref(og_x, a_in, params)
    assert out.shape == og_x.shape and out.dtype == og_x.dtype
    out_f32 = out.astype(jnp.float32)
    max_err = float(jnp.max(jnp.abs(out_f32 - ref)))
    assert jnp.allclose(out_f32, ref, atol=2e-2, rtol=2e-2), (
        f"mismatch vs reference (max |err| = {max_err})")

    print("KERNEL_OK")
</pallas_src>

<mosaic_0001>
module attributes {stable_mosaic.version = 11 : i64} {
  func.func @_gated_resnet_kernel(%arg0: i32, %arg1: i32, %arg2: memref<2x32x256xbf16, #tpu.memory_space<vmem>>, %arg3: memref<2x32x256xbf16, #tpu.memory_space<vmem>>, %arg4: memref<32x128xbf16, #tpu.memory_space<vmem>>, %arg5: memref<32x1xf32, #tpu.memory_space<vmem>>, %arg6: memref<64x64xbf16, #tpu.memory_space<vmem>>, %arg7: memref<64x1xf32, #tpu.memory_space<vmem>>, %arg8: memref<2x32x256xbf16, #tpu.memory_space<vmem>>) attributes {dimension_semantics = [#tpu.dimension_semantics<parallel>, #tpu.dimension_semantics<parallel>], iteration_bounds = array<i64: 1, 1>, scalar_prefetch = 0 : i64, scratch_operands = 0 : i64, tpu.core_type = #tpu.core_type<tc>, window_params = [{transform_indices = @transform_0, window_bounds = array<i64: 2, 32, 256>}, {transform_indices = @transform_1, window_bounds = array<i64: 2, 32, 256>}, {pipeline_mode = #tpu.pipeline_mode<synchronous>, transform_indices = @transform_2, window_bounds = array<i64: 32, 128>}, {pipeline_mode = #tpu.pipeline_mode<synchronous>, transform_indices = @transform_3, window_bounds = array<i64: 32, 1>}, {pipeline_mode = #tpu.pipeline_mode<synchronous>, transform_indices = @transform_4, window_bounds = array<i64: 64, 64>}, {pipeline_mode = #tpu.pipeline_mode<synchronous>, transform_indices = @transform_5, window_bounds = array<i64: 64, 1>}, {transform_indices = @transform_6, window_bounds = array<i64: 2, 32, 256>}]} {
    %c0 = arith.constant 0 : index
    %c0_0 = arith.constant 0 : index
    %0 = vector.load %arg4[%c0, %c0_0] : memref<32x128xbf16, #tpu.memory_space<vmem>>, vector<32x128xbf16>
    %c0_1 = arith.constant 0 : index
    %c0_2 = arith.constant 0 : index
    %1 = vector.load %arg5[%c0_1, %c0_2] : memref<32x1xf32, #tpu.memory_space<vmem>>, vector<32x1xf32>
    %c0_3 = arith.constant 0 : index
    %c0_4 = arith.constant 0 : index
    %2 = vector.load %arg6[%c0_3, %c0_4] : memref<64x64xbf16, #tpu.memory_space<vmem>>, vector<64x64xbf16>
    %c0_5 = arith.constant 0 : index
    %c0_6 = arith.constant 0 : index
    %3 = vector.load %arg7[%c0_5, %c0_6] : memref<64x1xf32, #tpu.memory_space<vmem>>, vector<64x1xf32>
    %c0_i32 = arith.constant 0 : i32
    %c2_i32 = arith.constant 2 : i32
    %4 = arith.addi %c0_i32, %c2_i32 : i32
    %c1_i32 = arith.constant 1 : i32
    scf.for %arg9 = %c0_i32 to %4 step %c1_i32  : i32 {
      %5 = arith.index_cast %arg9 : i32 to index
      %c0_8 = arith.constant 0 : index
      %c0_9 = arith.constant 0 : index
      %6 = vector.load %arg2[%5, %c0_8, %c0_9] : memref<2x32x256xbf16, #tpu.memory_space<vmem>>, vector<1x32x256xbf16>
      %7 = vector.shape_cast %6 : vector<1x32x256xbf16> to vector<32x256xbf16>
      %8 = arith.extf %7 : vector<32x256xbf16> to vector<32x256xf32>
      %9 = arith.index_cast %arg9 : i32 to index
      %c0_10 = arith.constant 0 : index
      %c0_11 = arith.constant 0 : index
      %10 = vector.load %arg3[%9, %c0_10, %c0_11] : memref<2x32x256xbf16, #tpu.memory_space<vmem>>, vector<1x32x256xbf16>
      %11 = vector.shape_cast %10 : vector<1x32x256xbf16> to vector<32x256xbf16>
      %12 = arith.extf %11 : vector<32x256xbf16> to vector<32x256xf32>
      %13 = math.absf %8 : vector<32x256xf32>
      %cst = arith.constant 0.000000e+00 : f32
      %14 = vector.broadcast %cst : f32 to vector<32x256xf32>
      %15 = arith.subf %14, %13 : vector<32x256xf32>
      %16 = math.exp %15 : vector<32x256xf32>
      %cst_12 = arith.constant 1.000000e+00 : f32
      %17 = vector.broadcast %cst_12 : f32 to vector<32x256xf32>
      %18 = arith.subf %16, %17 : vector<32x256xf32>
      %cst_13 = arith.constant 0.000000e+00 : f32
      %19 = vector.broadcast %cst_13 : f32 to vector<32x256xf32>
      %20 = arith.cmpf ogt, %8, %19 : vector<32x256xf32>
      %21 = arith.select %20, %8, %18 : vector<32x256xi1>, vector<32x256xf32>
      %cst_14 = arith.constant 0.000000e+00 : f32
      %22 = vector.broadcast %cst_14 : f32 to vector<32x256xf32>
      %23 = arith.subf %22, %8 : vector<32x256xf32>
      %24 = arith.select %20, %18, %23 : vector<32x256xi1>, vector<32x256xf32>
      %25 = arith.truncf %21 : vector<32x256xf32> to vector<32x256xbf16>
      %26 = arith.truncf %24 : vector<32x256xf32> to vector<32x256xbf16>
      %27 = math.absf %12 : vector<32x256xf32>
      %cst_15 = arith.constant 0.000000e+00 : f32
      %28 = vector.broadcast %cst_15 : f32 to vector<32x256xf32>
      %29 = arith.subf %28, %27 : vector<32x256xf32>
      %30 = math.exp %29 : vector<32x256xf32>
      %cst_16 = arith.constant 1.000000e+00 : f32
      %31 = vector.broadcast %cst_16 : f32 to vector<32x256xf32>
      %32 = arith.subf %30, %31 : vector<32x256xf32>
      %cst_17 = arith.constant 0.000000e+00 : f32
      %33 = vector.broadcast %cst_17 : f32 to vector<32x256xf32>
      %34 = arith.cmpf ogt, %12, %33 : vector<32x256xf32>
      %35 = arith.select %34, %12, %32 : vector<32x256xi1>, vector<32x256xf32>
      %cst_18 = arith.constant 0.000000e+00 : f32
      %36 = vector.broadcast %cst_18 : f32 to vector<32x256xf32>
      %37 = arith.subf %36, %12 : vector<32x256xf32>
      %38 = arith.select %34, %32, %37 : vector<32x256xi1>, vector<32x256xf32>
      %39 = arith.truncf %35 : vector<32x256xf32> to vector<32x256xbf16>
      %40 = arith.truncf %38 : vector<32x256xf32> to vector<32x256xbf16>
      %41 = tpu.concatenate %25, %26, %39, %40 in 0 : vector<32x256xbf16>, vector<32x256xbf16>, vector<32x256xbf16>, vector<32x256xbf16> -> vector<128x256xbf16>
      %cst_19 = arith.constant dense<0.000000e+00> : vector<32x256xf32>
      %42 = tpu.matmul %0, %41, %cst_19 {dimension_numbers = #tpu.dot_dimension_numbers<[1], [0], [0], [1], [0, 0, 1, 1], [], []>} : vector<32x128xbf16>, vector<128x256xbf16>, vector<32x256xf32> -> vector<32x256xf32>
      %43 = vector.broadcast %1 : vector<32x1xf32> to vector<32x256xf32>
      %44 = arith.addf %42, %43 : vector<32x256xf32>
      %45 = math.absf %44 : vector<32x256xf32>
      %cst_20 = arith.constant 0.000000e+00 : f32
      %46 = vector.broadcast %cst_20 : f32 to vector<32x256xf32>
      %47 = arith.subf %46, %45 : vector<32x256xf32>
      %48 = math.exp %47 : vector<32x256xf32>
      %cst_21 = arith.constant 1.000000e+00 : f32
      %49 = vector.broadcast %cst_21 : f32 to vector<32x256xf32>
      %50 = arith.subf %48, %49 : vector<32x256xf32>
      %cst_22 = arith.constant 0.000000e+00 : f32
      %51 = vector.broadcast %cst_22 : f32 to vector<32x256xf32>
      %52 = arith.cmpf ogt, %44, %51 : vector<32x256xf32>
      %53 = arith.select %52, %44, %50 : vector<32x256xi1>, vector<32x256xf32>
      %cst_23 = arith.constant 0.000000e+00 : f32
      %54 = vector.broadcast %cst_23 : f32 to vector<32x256xf32>
      %55 = arith.subf %54, %44 : vector<32x256xf32>
      %56 = arith.select %52, %50, %55 : vector<32x256xi1>, vector<32x256xf32>
      %57 = arith.truncf %53 : vector<32x256xf32> to vector<32x256xbf16>
      %58 = arith.truncf %56 : vector<32x256xf32> to vector<32x256xbf16>
      %59 = tpu.concatenate %57, %58 in 0 : vector<32x256xbf16>, vector<32x256xbf16> -> vector<64x256xbf16>
      %cst_24 = arith.constant dense<0.000000e+00> : vector<64x256xf32>
      %60 = tpu.matmul %2, %59, %cst_24 {dimension_numbers = #tpu.dot_dimension_numbers<[1], [0], [0], [1], [0, 0, 1, 1], [], []>} : vector<64x64xbf16>, vector<64x256xbf16>, vector<64x256xf32> -> vector<64x256xf32>
      %61 = vector.broadcast %3 : vector<64x1xf32> to vector<64x256xf32>
      %62 = arith.addf %60, %61 : vector<64x256xf32>
      %63 = vector.extract_strided_slice %62 {offsets = [0, 0], sizes = [32, 256], strides = [1, 1]} : vector<64x256xf32> to vector<32x256xf32>
      %64 = vector.extract_strided_slice %62 {offsets = [32, 0], sizes = [32, 256], strides = [1, 1]} : vector<64x256xf32> to vector<32x256xf32>
      %65 = arith.negf %64 : vector<32x256xf32>
      %66 = math.exp %65 : vector<32x256xf32>
      %cst_25 = arith.constant 1.000000e+00 : f32
      %67 = vector.broadcast %cst_25 : f32 to vector<32x256xf32>
      %68 = arith.addf %67, %66 : vector<32x256xf32>
      %69 = arith.divf %67, %68 : vector<32x256xf32>
      %70 = arith.mulf %63, %69 : vector<32x256xf32>
      %71 = arith.addf %8, %70 : vector<32x256xf32>
      %72 = arith.truncf %71 : vector<32x256xf32> to vector<32x256xbf16>
      %73 = arith.index_cast %arg9 : i32 to index
      %c0_26 = arith.constant 0 : index
      %c0_27 = arith.constant 0 : index
      %74 = vector.load %arg8[%73, %c0_26, %c0_27] : memref<2x32x256xbf16, #tpu.memory_space<vmem>>, vector<1x32x256xbf16>
      %75 = vector.shape_cast %74 : vector<1x32x256xbf16> to vector<32x256xbf16>
      %76 = vector.shape_cast %72 : vector<32x256xbf16> to vector<1x32x256xbf16>
      tpu.vector_store %arg8[%73, %c0_26, %c0_27], %76 {strides = array<i32>} : memref<2x32x256xbf16, #tpu.memory_space<vmem>>, vector<1x32x256xbf16>,
    }
    %c2_i32_7 = arith.constant 2 : i32
    return
  }
  func.func @transform_0(%arg0: i32, %arg1: i32) -> (i32, i32, i32) {
    %c0_i32 = arith.constant 0 : i32
    %c0_i32_0 = arith.constant 0 : i32
    return %arg0, %c0_i32, %arg1 : i32, i32, i32
  }
  func.func @transform_1(%arg0: i32, %arg1: i32) -> (i32, i32, i32) {
    %c0_i32 = arith.constant 0 : i32
    %c0_i32_0 = arith.constant 0 : i32
    return %arg0, %c0_i32, %arg1 : i32, i32, i32
  }
  func.func @transform_2(%arg0: i32, %arg1: i32) -> (i32, i32) {
    %c0_i32 = arith.constant 0 : i32
    %c0_i32_0 = arith.constant 0 : i32
    %c0_i32_1 = arith.constant 0 : i32
    return %c0_i32, %c0_i32_0 : i32, i32
  }
  func.func @transform_3(%arg0: i32, %arg1: i32) -> (i32, i32) {
    %c0_i32 = arith.constant 0 : i32
    %c0_i32_0 = arith.constant 0 : i32
    %c0_i32_1 = arith.constant 0 : i32
    return %c0_i32, %c0_i32_0 : i32, i32
  }
  func.func @transform_4(%arg0: i32, %arg1: i32) -> (i32, i32) {
    %c0_i32 = arith.constant 0 : i32
    %c0_i32_0 = arith.constant 0 : i32
    %c0_i32_1 = arith.constant 0 : i32
    return %c0_i32, %c0_i32_0 : i32, i32
  }
  func.func @transform_5(%arg0: i32, %arg1: i32) -> (i32, i32) {
    %c0_i32 = arith.constant 0 : i32
    %c0_i32_0 = arith.constant 0 : i32
    %c0_i32_1 = arith.constant 0 : i32
    return %c0_i32, %c0_i32_0 : i32, i32
  }
  func.func @transform_6(%arg0: i32, %arg1: i32) -> (i32, i32, i32) {
    %c0_i32 = arith.constant 0 : i32
    %c0_i32_0 = arith.constant 0 : i32
    return %arg0, %c0_i32, %arg1 : i32, i32, i32
  }
}

</mosaic_0001>

<llo_original>
// kernel: tpu_custom_call.1
$region0: #{tpu_custom_call.1}
  #allocation0 [shape = 'u32[]', space=smem, size = 0x4, offset = 0x4, fixed_abs, tag = 'smem constant byte address 0x4 - core index']
  #allocation1 [shape = 'u32[144,128]{1,0:T(1,128)}', space=vmem, size = 0x12000, scoped, tag = 'internal scratch']
  %s0 = inlined_call_operand.vmem [shape: bf16[2,32,256], index: 0, kind: input, shape index: {}]
  %s1 = inlined_call_operand.hbm [shape: bf16[2,32,256], index: 1, kind: input, shape index: {}]
  %s2 = inlined_call_operand.hbm [shape: bf16[32,128], index: 2, kind: input, shape index: {}]
  %s3 = inlined_call_operand.vmem [shape: f32[32,1], index: 3, kind: input, shape index: {}]
  %s4 = inlined_call_operand.vmem [shape: bf16[64,64], index: 4, kind: input, shape index: {}]
  %s5 = inlined_call_operand.vmem [shape: f32[64,1], index: 5, kind: input, shape index: {}]
  %s6 = inlined_call_operand.hbm [shape: bf16[2,32,256], index: 6, kind: output, shape index: {}]
  %s7 = sld [smem:[#allocation0]]
  $region49: #{tpu_custom_call.1} parent=0
    _
  %s9 = ssub.s32 1, %s7
  %s10 = scalar_select 0, %s9, %s7
  $region1: #{tpu_custom_call.1} parent=0
    #allocation2 [shape = 'u8[32768]{0}', space=vmem, size = 0x8000, scoped, tag = 'input window, operand 1, single buffered']
    #allocation3 [shape = 's32[1]{0}', space=sflag, size = 0x4, scoped, tag = 'scoped memory for tpu_custom_call.1']
    #allocation4 [shape = 's32[1]{0}', space=sflag, size = 0x4, scoped, tag = 'scoped memory for tpu_custom_call.1']
    #allocation5 [shape = 'u8[8192]{0}', space=vmem, size = 0x2000, scoped, tag = 'input window, operand 2, single buffered']
    #allocation6 [shape = 's32[1]{0}', space=sflag, size = 0x4, scoped, tag = 'scoped memory for tpu_custom_call.1']
    #allocation7 [shape = 'u8[32768]{0}', space=vmem, size = 0x8000, scoped, tag = 'output window, operand 0, single buffered']
    %11 = vsyncpa [#allocation3], 0
    %12 = vsyncpa [#allocation6], 0
    %13 = vsyncpa [#allocation4], 0
    // Predicated region
    $region2: #{tpu_custom_call.1} parent=1 // pred_check
      _
    $region3: #{tpu_custom_call.1} parent=1 // pred_check_branch
      %15 = sbr.rel (0) target = $region5
    $region4: #{tpu_custom_call.1} parent=1 // pred_region
      _
    $region5: #{tpu_custom_call.1} parent=1 // pred_fallthru
      _
    // Predicated region
    $region6: #{tpu_custom_call.1} parent=1 // pred_check
      _
    $region7: #{tpu_custom_call.1} parent=1 // pred_check_branch
      %17 = sbr.rel (0) target = $region9
    $region8: #{tpu_custom_call.1} parent=1 // pred_region
      %s19 = ssub.s32 1024, 1024
      %20 = vsyncadd [#allocation3], %s19
      %s21 = sshll.u32 [#allocation2], 4
      %s22 = int_to_ptr.vmem [resolvable:$true] %s21
      %27 = dma.hbm_to_vmem [thread:$0]  %s1, 1024, %s22, [#allocation3], 128, 128, 8
    $region9: #{tpu_custom_call.1} parent=1 // pred_fallthru
      _
    // Predicated region
    $region10: #{tpu_custom_call.1} parent=1 // pred_check
      _
    $region11: #{tpu_custom_call.1} parent=1 // pred_check_branch
      %29 = sbr.rel (0) target = $region13
    $region12: #{tpu_custom_call.1} parent=1 // pred_region
      %s31 = ssub.s32 256, 256
      %32 = vsyncadd [#allocation6], %s31
      %s33 = sshll.u32 [#allocation5], 4
      %s34 = int_to_ptr.vmem [resolvable:$true] %s33
      %39 = dma.hbm_to_vmem [thread:$0]  %s2, 256, %s34, [#allocation6], 64, 64, 4
    $region13: #{tpu_custom_call.1} parent=1 // pred_fallthru
      _
    // Predicated region
    $region14: #{tpu_custom_call.1} parent=1 // pred_check
      _
    $region15: #{tpu_custom_call.1} parent=1 // pred_check_branch
      %41 = sbr.rel (0) target = $region17
    $region16: #{tpu_custom_call.1} parent=1 // pred_region
      _
    $region17: #{tpu_custom_call.1} parent=1 // pred_fallthru
      _
    // Predicated region
    $region18: #{tpu_custom_call.1} parent=1 // pred_check
      _
    $region19: #{tpu_custom_call.1} parent=1 // pred_check_branch
      %43 = sbr.rel (0) target = $region21
    $region20: #{tpu_custom_call.1} parent=1 // pred_region
      _
    $region21: #{tpu_custom_call.1} parent=1 // pred_fallthru
      _
    // Predicated region
    $region22: #{tpu_custom_call.1} parent=1 // pred_check
      _
    $region23: #{tpu_custom_call.1} parent=1 // pred_check_branch
      %45 = sbr.rel (0) target = $region25
    $region24: #{tpu_custom_call.1} parent=1 // pred_region
      _
    $region25: #{tpu_custom_call.1} parent=1 // pred_fallthru
      _
    // Predicated region
    $region26: #{tpu_custom_call.1} parent=1 // pred_check
      _
    $region27: #{tpu_custom_call.1} parent=1 // pred_check_branch
      %47 = sbr.rel (0) target = $region29
    $region28: #{tpu_custom_call.1} parent=1 // pred_region
      %48 = dma.done [#allocation3], 1024
    $region29: #{tpu_custom_call.1} parent=1 // pred_fallthru
      _
    // Predicated region
    $region30: #{tpu_custom_call.1} parent=1 // pred_check
      _
    $region31: #{tpu_custom_call.1} parent=1 // pred_check_branch
      %50 = sbr.rel (0) target = $region33
    $region32: #{tpu_custom_call.1} parent=1 // pred_region
      %51 = dma.done [#allocation6], 256
    $region33: #{tpu_custom_call.1} parent=1 // pred_fallthru
      _
    %v53 = vld [vmem:[#allocation5] sm:$0xf]
    %v54 = vld [vmem:[#allocation5 + $0x4] sm:$0xf]
    %v55 = vld [vmem:[#allocation5 + $0x8] sm:$0xf]
    %v56 = vld [vmem:[#allocation5 + $0xc] sm:$0xf]
    %v57 = vld [vmem:[%s3] sm:$0xff]
    %v58 = vld [vmem:[%s3 + $0x8] sm:$0xff]
    %v59 = vld [vmem:[%s3 + $0x10] sm:$0xff]
    %v60 = vld [vmem:[%s3 + $0x18] sm:$0xff]
    %v61 = vld [vmem:[%s4] sm:$0xf]
    %v62 = vld [vmem:[%s4 + $0x4] sm:$0xf]
    %v63 = vld [vmem:[%s4 + $0x8] sm:$0xf]
    %v64 = vld [vmem:[%s4 + $0xc] sm:$0xf]
    %v65 = vld [vmem:[%s4 + $0x10] sm:$0xf]
    %v66 = vld [vmem:[%s4 + $0x14] sm:$0xf]
    %v67 = vld [vmem:[%s4 + $0x18] sm:$0xf]
    %v68 = vld [vmem:[%s4 + $0x1c] sm:$0xf]
    %v69 = vld [vmem:[%s5] sm:$0xff]
    %v70 = vld [vmem:[%s5 + $0x8] sm:$0xff]
    %v71 = vld [vmem:[%s5 + $0x10] sm:$0xff]
    %v72 = vld [vmem:[%s5 + $0x18] sm:$0xff]
    %v73 = vld [vmem:[%s5 + $0x20] sm:$0xff]
    %v74 = vld [vmem:[%s5 + $0x28] sm:$0xff]
    %v75 = vld [vmem:[%s5 + $0x30] sm:$0xff]
    %v76 = vld [vmem:[%s5 + $0x38] sm:$0xff]
    loop: start=0, step=1, limit=2
    $region34: #{tpu_custom_call.1} parent=1 // loop_pre_header
      _
    $region35: #{tpu_custom_call.1} parent=1 // loop_header
      %s78 = sphi 0, %s82
      %p79 = scmp.ge.s32.totalorder %s78, 2
    $region36: #{tpu_custom_call.1} parent=1 // loop_header_branch
      %81 = sbr.rel (%p79) target = $region40
    $region37: #{tpu_custom_call.1} parent=1 // loop_body
      %s83 = smul.u32 %s78, 8
      %s84 = smul.addr %s83, 4
      %s85 = scalar_lea.vmem %s0, %s84
      %v86 = vld [vmem:[%s85] sm:$0xff]
      %v87 = vld [vmem:[%s85 + $0x8] sm:$0xff]
      %v88 = vld [vmem:[%s85 + $0x10] sm:$0xff]
      %v89 = vld [vmem:[%s85 + $0x18] sm:$0xff]
      %v90 = vunpack.c.l.bf16 %v86
      %v91 = vunpack.c.h.bf16 %v86
      %v92 = vunpack.c.l.bf16 %v87
      %v93 = vunpack.c.h.bf16 %v87
      %v94 = vunpack.c.l.bf16 %v88
      %v95 = vunpack.c.h.bf16 %v88
      %v96 = vunpack.c.l.bf16 %v89
      %v97 = vunpack.c.h.bf16 %v89
      %s98 = smul.addr %s83, 4
      %s99 = scalar_lea.vmem [#allocation2], %s98
      %v100 = vld [vmem:[%s99] sm:$0xff]
      %v101 = vld [vmem:[%s99 + $0x8] sm:$0xff]
      %v102 = vld [vmem:[%s99 + $0x10] sm:$0xff]
      %v103 = vld [vmem:[%s99 + $0x18] sm:$0xff]
      %v104 = vunpack.c.l.bf16 %v100
      %v105 = vunpack.c.h.bf16 %v100
      %v106 = vunpack.c.l.bf16 %v101
      %v107 = vunpack.c.h.bf16 %v101
      %v108 = vunpack.c.l.bf16 %v102
      %v109 = vunpack.c.h.bf16 %v102
      %v110 = vunpack.c.l.bf16 %v103
      %v111 = vunpack.c.h.bf16 %v103
      %v112 = vand.u32 2147483647, %v90
      %v113 = vand.u32 2147483647, %v91
      %v114 = vand.u32 2147483647, %v92
      %v115 = vand.u32 2147483647, %v93
      %v116 = vand.u32 2147483647, %v94
      %v117 = vand.u32 2147483647, %v95
      %v118 = vand.u32 2147483647, %v96
      %v119 = vand.u32 2147483647, %v97
      %v120 = vsub.f32 0.0, %v112
      %v121 = vsub.f32 0.0, %v113
      %v122 = vsub.f32 0.0, %v114
      %v123 = vsub.f32 0.0, %v115
      %v124 = vsub.f32 0.0, %v116
      %v125 = vsub.f32 0.0, %v117
      %v126 = vsub.f32 0.0, %v118
      %v127 = vsub.f32 0.0, %v119
      %v128 = vmul.f32 %v120, 1.442695
      %v129 = vpow.pop %v128
      %v130 = vmul.f32 %v121, 1.442695
      %v131 = vpow.pop %v130
      %v132 = vmul.f32 %v122, 1.442695
      %v133 = vpow.pop %v132
      %v134 = vmul.f32 %v123, 1.442695
      %v135 = vpow.pop %v134
      %v136 = vmul.f32 %v124, 1.442695
      %v137 = vpow.pop %v136
      %v138 = vmul.f32 %v125, 1.442695
      %v139 = vpow.pop %v138
      %v140 = vmul.f32 %v126, 1.442695
      %v141 = vpow.pop %v140
      %v142 = vmul.f32 %v127, 1.442695
      %v143 = vpow.pop %v142
      %v144 = vsub.f32 %v129, 1.0
      %v145 = vsub.f32 %v131, 1.0
      %v146 = vsub.f32 %v133, 1.0
      %v147 = vsub.f32 %v135, 1.0
      %v148 = vsub.f32 %v137, 1.0
      %v149 = vsub.f32 %v139, 1.0
      %v150 = vsub.f32 %v141, 1.0
      %v151 = vsub.f32 %v143, 1.0
      %vm152 = vcmp.gt.f32.partialorder %v90, 0.0
      %vm153 = vcmp.gt.f32.partialorder %v91, 0.0
      %vm154 = vcmp.gt.f32.partialorder %v92, 0.0
      %vm155 = vcmp.gt.f32.partialorder %v93, 0.0
      %vm156 = vcmp.gt.f32.partialorder %v94, 0.0
      %vm157 = vcmp.gt.f32.partialorder %v95, 0.0
      %vm158 = vcmp.gt.f32.partialorder %v96, 0.0
      %vm159 = vcmp.gt.f32.partialorder %v97, 0.0
      %v160 = vsel %vm152, %v90, %v144
      %v161 = vsel %vm153, %v91, %v145
      %v162 = vsel %vm154, %v92, %v146
      %v163 = vsel %vm155, %v93, %v147
      %v164 = vsel %vm156, %v94, %v148
      %v165 = vsel %vm157, %v95, %v149
      %v166 = vsel %vm158, %v96, %v150
      %v167 = vsel %vm159, %v97, %v151
      %v168 = vsub.f32 0.0, %v90
      %v169 = vsub.f32 0.0, %v91
      %v170 = vsub.f32 0.0, %v92
      %v171 = vsub.f32 0.0, %v93
      %v172 = vsub.f32 0.0, %v94
      %v173 = vsub.f32 0.0, %v95
      %v174 = vsub.f32 0.0, %v96
      %v175 = vsub.f32 0.0, %v97
      %v176 = vsel %vm152, %v144, %v168
      %v177 = vsel %vm153, %v145, %v169
      %v178 = vsel %vm154, %v146, %v170
      %v179 = vsel %vm155, %v147, %v171
      %v180 = vsel %vm156, %v148, %v172
      %v181 = vsel %vm157, %v149, %v173
      %v182 = vsel %vm158, %v150, %v174
      %v183 = vsel %vm159, %v151, %v175
      %v184 = vpack.c.bf16 %v162, %v160
      %v185 = vpack.c.bf16 %v163, %v161
      %v186 = vpack.c.bf16 %v166, %v164
      %v187 = vpack.c.bf16 %v167, %v165
      %v188 = vpack.c.bf16 %v178, %v176
      %v189 = vpack.c.bf16 %v179, %v177
      %v190 = vpack.c.bf16 %v182, %v180
      %v191 = vpack.c.bf16 %v183, %v181
      %v192 = vand.u32 2147483647, %v104
      %v193 = vand.u32 2147483647, %v105
      %v194 = vand.u32 2147483647, %v106
      %v195 = vand.u32 2147483647, %v107
      %v196 = vand.u32 2147483647, %v108
      %v197 = vand.u32 2147483647, %v109
      %v198 = vand.u32 2147483647, %v110
      %v199 = vand.u32 2147483647, %v111
      %v200 = vsub.f32 0.0, %v192
      %v201 = vsub.f32 0.0, %v193
      %v202 = vsub.f32 0.0, %v194
      %v203 = vsub.f32 0.0, %v195
      %v204 = vsub.f32 0.0, %v196
      %v205 = vsub.f32 0.0, %v197
      %v206 = vsub.f32 0.0, %v198
      %v207 = vsub.f32 0.0, %v199
      %v208 = vmul.f32 %v200, 1.442695
      %v209 = vpow.pop %v208
      %v210 = vmul.f32 %v201, 1.442695
      %v211 = vpow.pop %v210
      %v212 = vmul.f32 %v202, 1.442695
      %v213 = vpow.pop %v212
      %v214 = vmul.f32 %v203, 1.442695
      %v215 = vpow.pop %v214
      %v216 = vmul.f32 %v204, 1.442695
      %v217 = vpow.pop %v216
      %v218 = vmul.f32 %v205, 1.442695
      %v219 = vpow.pop %v218
      %v220 = vmul.f32 %v206, 1.442695
      %v221 = vpow.pop %v220
      %v222 = vmul.f32 %v207, 1.442695
      %v223 = vpow.pop %v222
      %v224 = vsub.f32 %v209, 1.0
      %v225 = vsub.f32 %v211, 1.0
      %v226 = vsub.f32 %v213, 1.0
      %v227 = vsub.f32 %v215, 1.0
      %v228 = vsub.f32 %v217, 1.0
      %v229 = vsub.f32 %v219, 1.0
      %v230 = vsub.f32 %v221, 1.0
      %v231 = vsub.f32 %v223, 1.0
      %vm232 = vcmp.gt.f32.partialorder %v104, 0.0
      %vm233 = vcmp.gt.f32.partialorder %v105, 0.0
      %vm234 = vcmp.gt.f32.partialorder %v106, 0.0
      %vm235 = vcmp.gt.f32.partialorder %v107, 0.0
      %vm236 = vcmp.gt.f32.partialorder %v108, 0.0
      %vm237 = vcmp.gt.f32.partialorder %v109, 0.0
      %vm238 = vcmp.gt.f32.partialorder %v110, 0.0
      %vm239 = vcmp.gt.f32.partialorder %v111, 0.0
      %v240 = vsel %vm232, %v104, %v224
      %v241 = vsel %vm233, %v105, %v225
      %v242 = vsel %vm234, %v106, %v226
      %v243 = vsel %vm235, %v107, %v227
      %v244 = vsel %vm236, %v108, %v228
      %v245 = vsel %vm237, %v109, %v229
      %v246 = vsel %vm238, %v110, %v230
      %v247 = vsel %vm239, %v111, %v231
      %v248 = vsub.f32 0.0, %v104
      %v249 = vsub.f32 0.0, %v105
      %v250 = vsub.f32 0.0, %v106
      %v251 = vsub.f32 0.0, %v107
      %v252 = vsub.f32 0.0, %v108
      %v253 = vsub.f32 0.0, %v109
      %v254 = vsub.f32 0.0, %v110
      %v255 = vsub.f32 0.0, %v111
      %v256 = vsel %vm232, %v224, %v248
      %v257 = vsel %vm233, %v225, %v249
      %v258 = vsel %vm234, %v226, %v250
      %v259 = vsel %vm235, %v227, %v251
      %v260 = vsel %vm236, %v228, %v252
      %v261 = vsel %vm237, %v229, %v253
      %v262 = vsel %vm238, %v230, %v254
      %v263 = vsel %vm239, %v231, %v255
      %v264 = vpack.c.bf16 %v242, %v240
      %v265 = vpack.c.bf16 %v243, %v241
      %v266 = vpack.c.bf16 %v246, %v244
      %v267 = vpack.c.bf16 %v247, %v245
      %v268 = vpack.c.bf16 %v258, %v256
      %v269 = vpack.c.bf16 %v259, %v257
      %v270 = vpack.c.bf16 %v262, %v260
      %v271 = vpack.c.bf16 %v263, %v261
      %273 = vset.pattern.permute.xlu0 0
      %274 = vperm.xlu0 %273, %v57
      %v275 = vpop.permute.xlu0 %274
      %278 = vset.pattern.permute.xlu0 0
      %279 = vperm.xlu0 %278, %v58
      %v280 = vpop.permute.xlu0 %279
      %283 = vset.pattern.permute.xlu0 0
      %284 = vperm.xlu0 %283, %v59
      %v285 = vpop.permute.xlu0 %284
      %288 = vset.pattern.permute.xlu0 0
      %289 = vperm.xlu0 %288, %v60
      %v290 = vpop.permute.xlu0 %289
      %v296 = vunpack.c.l.b16 %v53
      %v297 = vunpack.c.l.b16 %v54
      %v298 = vunpack.c.l.b16 %v55
      %v299 = vunpack.c.l.b16 %v56
      %v300 = vpack.c.b16 %v297, %v296
      %v301 = vpack.c.b16 %v299, %v298
      %304 = vmatprep.subr.bf16.mxu0 %v271
      %305 = vmatpush1.bf16.msra.mxu0 %v270
      %306 = vmatprep.subr.bf16.mxu0 %v269
      %307 = vmatpush1.bf16.msra.mxu0 %v268
      %308 = vmatprep.subr.bf16.mxu0 %v267
      %309 = vmatpush1.bf16.msra.mxu0 %v266
      %310 = vmatprep.subr.bf16.mxu0 %v265
      %311 = vmatpush1.bf16.msra.mxu0 %v264
      %312 = vmatprep.subr.bf16.mxu0 %v191
      %313 = vmatpush1.bf16.msra.mxu0 %v190
      %314 = vmatprep.subr.bf16.mxu0 %v189
      %315 = vmatpush1.bf16.msra.mxu0 %v188
      %316 = vmatprep.subr.bf16.mxu0 %v187
      %317 = vmatpush1.bf16.msra.mxu0 %v186
      %318 = vmatprep.subr.bf16.mxu0 %v185
      %319 = vmatpush1.bf16.msra.mxu0 %v184
      %320 = vmatprep.subr.bf16.mxu0 0
      %321 = vmatpush2.bf16.msra.mxu0 0
      %322 = vmatprep.subr.bf16.mxu0 0
      %323 = vmatpush2.bf16.msra.mxu0 0
      %324 = vmatprep.subr.bf16.mxu0 0
      %325 = vmatpush2.bf16.msra.mxu0 0
      %326 = vmatprep.subr.bf16.mxu0 0
      %327 = vmatpush2.bf16.msra.mxu0 0
      %328 = vmatprep.subr.bf16.mxu0 0
      %329 = vmatpush2.bf16.msra.mxu0 0
      %330 = vmatprep.subr.bf16.mxu0 0
      %331 = vmatpush2.bf16.msra.mxu0 0
      %332 = vmatprep.subr.bf16.mxu0 0
      %333 = vmatpush2.bf16.msra.mxu0 0
      %334 = vmatprep.subr.bf16.mxu0 0
      %335 = vmatpush2.bf16.msra.mxu0 0
      %336 = vmatprep.mubr.bf16.mxu0 0
      %337 = vmatmul.mubr.bf16.gmra.mxu0 %v300
      %v338 = vpop.f32.mrf.mxu0
      %v339 = vadd.f32 %v275, %v338
      %v340 = vpop.f32.mrf.mxu0
      %v341 = vadd.f32 %v275, %v340
      %v342 = vpop.f32.mrf.mxu0
      %v343 = vadd.f32 %v280, %v342
      %v344 = vpop.f32.mrf.mxu0
      %v345 = vadd.f32 %v280, %v344
      %346 = vmatprep.mubr.bf16.mxu0 0
      %347 = vmatmul.mubr.bf16.gmra.mxu0 %v301
      %v348 = vpop.f32.mrf.mxu0
      %v349 = vadd.f32 %v285, %v348
      %v350 = vpop.f32.mrf.mxu0
      %v351 = vadd.f32 %v285, %v350
      %v352 = vpop.f32.mrf.mxu0
      %v353 = vadd.f32 %v290, %v352
      %v354 = vpop.f32.mrf.mxu0
      %v355 = vadd.f32 %v290, %v354
      %356 = vdwg.mxu0
      %v357 = vand.u32 2147483647, %v339
      %v358 = vand.u32 2147483647, %v341
      %v359 = vand.u32 2147483647, %v343
      %v360 = vand.u32 2147483647, %v345
      %v361 = vand.u32 2147483647, %v349
      %v362 = vand.u32 2147483647, %v351
      %v363 = vand.u32 2147483647, %v353
      %v364 = vand.u32 2147483647, %v355
      %v365 = vsub.f32 0.0, %v357
      %v366 = vsub.f32 0.0, %v358
      %v367 = vsub.f32 0.0, %v359
      %v368 = vsub.f32 0.0, %v360
      %v369 = vsub.f32 0.0, %v361
      %v370 = vsub.f32 0.0, %v362
      %v371 = vsub.f32 0.0, %v363
      %v372 = vsub.f32 0.0, %v364
      %v373 = vmul.f32 %v365, 1.442695
      %v374 = vpow.pop %v373
      %v375 = vmul.f32 %v366, 1.442695
      %v376 = vpow.pop %v375
      %v377 = vmul.f32 %v367, 1.442695
      %v378 = vpow.pop %v377
      %v379 = vmul.f32 %v368, 1.442695
      %v380 = vpow.pop %v379
      %v381 = vmul.f32 %v369, 1.442695
      %v382 = vpow.pop %v381
      %v383 = vmul.f32 %v370, 1.442695
      %v384 = vpow.pop %v383
      %v385 = vmul.f32 %v371, 1.442695
      %v386 = vpow.pop %v385
      %v387 = vmul.f32 %v372, 1.442695
      %v388 = vpow.pop %v387
      %v389 = vsub.f32 %v374, 1.0
      %v390 = vsub.f32 %v376, 1.0
      %v391 = vsub.f32 %v378, 1.0
      %v392 = vsub.f32 %v380, 1.0
      %v393 = vsub.f32 %v382, 1.0
      %v394 = vsub.f32 %v384, 1.0
      %v395 = vsub.f32 %v386, 1.0
      %v396 = vsub.f32 %v388, 1.0
      %vm397 = vcmp.gt.f32.partialorder %v339, 0.0
      %vm398 = vcmp.gt.f32.partialorder %v341, 0.0
      %vm399 = vcmp.gt.f32.partialorder %v343, 0.0
      %vm400 = vcmp.gt.f32.partialorder %v345, 0.0
      %vm401 = vcmp.gt.f32.partialorder %v349, 0.0
      %vm402 = vcmp.gt.f32.partialorder %v351, 0.0
      %vm403 = vcmp.gt.f32.partialorder %v353, 0.0
      %vm404 = vcmp.gt.f32.partialorder %v355, 0.0
      %v405 = vsel %vm397, %v339, %v389
      %v406 = vsel %vm398, %v341, %v390
      %v407 = vsel %vm399, %v343, %v391
      %v408 = vsel %vm400, %v345, %v392
      %v409 = vsel %vm401, %v349, %v393
      %v410 = vsel %vm402, %v351, %v394
      %v411 = vsel %vm403, %v353, %v395
      %v412 = vsel %vm404, %v355, %v396
      %v413 = vsub.f32 0.0, %v339
      %v414 = vsub.f32 0.0, %v341
      %v415 = vsub.f32 0.0, %v343
      %v416 = vsub.f32 0.0, %v345
      %v417 = vsub.f32 0.0, %v349
      %v418 = vsub.f32 0.0, %v351
      %v419 = vsub.f32 0.0, %v353
      %v420 = vsub.f32 0.0, %v355
      %v421 = vsel %vm397, %v389, %v413
      %v422 = vsel %vm398, %v390, %v414
      %v423 = vsel %vm399, %v391, %v415
      %v424 = vsel %vm400, %v392, %v416
      %v425 = vsel %vm401, %v393, %v417
      %v426 = vsel %vm402, %v394, %v418
      %v427 = vsel %vm403, %v395, %v419
      %v428 = vsel %vm404, %v396, %v420
      %v429 = vpack.c.bf16 %v407, %v405
      %v430 = vpack.c.bf16 %v408, %v406
      %v431 = vpack.c.bf16 %v411, %v409
      %v432 = vpack.c.bf16 %v412, %v410
      %v433 = vpack.c.bf16 %v423, %v421
      %v434 = vpack.c.bf16 %v424, %v422
      %v435 = vpack.c.bf16 %v427, %v425
      %v436 = vpack.c.bf16 %v428, %v426
      %438 = vset.pattern.permute.xlu0 0
      %439 = vperm.xlu0 %438, %v69
      %v440 = vpop.permute.xlu0 %439
      %443 = vset.pattern.permute.xlu0 0
      %444 = vperm.xlu0 %443, %v70
      %v445 = vpop.permute.xlu0 %444
      %448 = vset.pattern.permute.xlu0 0
      %449 = vperm.xlu0 %448, %v71
      %v450 = vpop.permute.xlu0 %449
      %453 = vset.pattern.permute.xlu0 0
      %454 = vperm.xlu0 %453, %v72
      %v455 = vpop.permute.xlu0 %454
      %458 = vset.pattern.permute.xlu0 0
      %459 = vperm.xlu0 %458, %v73
      %v460 = vpop.permute.xlu0 %459
      %463 = vset.pattern.permute.xlu0 0
      %464 = vperm.xlu0 %463, %v74
      %v465 = vpop.permute.xlu0 %464
      %468 = vset.pattern.permute.xlu0 0
      %469 = vperm.xlu0 %468, %v75
      %v470 = vpop.permute.xlu0 %469
      %473 = vset.pattern.permute.xlu0 0
      %474 = vperm.xlu0 %473, %v76
      %v475 = vpop.permute.xlu0 %474
      %v485 = vunpack.c.l.b16 %v61
      %v486 = vunpack.c.l.b16 %v62
      %v487 = vunpack.c.l.b16 %v63
      %v488 = vunpack.c.l.b16 %v64
      %v489 = vunpack.c.l.b16 %v65
      %v490 = vunpack.c.l.b16 %v66
      %v491 = vunpack.c.l.b16 %v67
      %v492 = vunpack.c.l.b16 %v68
      %v493 = vpack.c.b16 %v486, %v485
      %v494 = vpack.c.b16 %v488, %v487
      %v495 = vpack.c.b16 %v490, %v489
      %v496 = vpack.c.b16 %v492, %v491
      %vm497 = vcmask 523264
      %v499 = vsel %vm497, %v493, 0
      %v502 = vsel %vm497, %v494, 0
      %v505 = vsel %vm497, %v495, 0
      %v508 = vsel %vm497, %v496, 0
      %510 = vmatprep.subr.bf16.mxu0 0
      %511 = vmatpush1.bf16.msra.mxu0 0
      %512 = vmatprep.subr.bf16.mxu0 0
      %513 = vmatpush1.bf16.msra.mxu0 0
      %514 = vmatprep.subr.bf16.mxu0 0
      %515 = vmatpush1.bf16.msra.mxu0 0
      %516 = vmatprep.subr.bf16.mxu0 0
      %517 = vmatpush1.bf16.msra.mxu0 0
      %518 = vmatprep.subr.bf16.mxu0 %v436
      %519 = vmatpush1.bf16.msra.mxu0 %v435
      %520 = vmatprep.subr.bf16.mxu0 %v434
      %521 = vmatpush1.bf16.msra.mxu0 %v433
      %522 = vmatprep.subr.bf16.mxu0 %v432
      %523 = vmatpush1.bf16.msra.mxu0 %v431
      %524 = vmatprep.subr.bf16.mxu0 %v430
      %525 = vmatpush1.bf16.msra.mxu0 %v429
      %526 = vmatprep.subr.bf16.mxu0 0
      %527 = vmatpush2.bf16.msra.mxu0 0
      %528 = vmatprep.subr.bf16.mxu0 0
      %529 = vmatpush2.bf16.msra.mxu0 0
      %530 = vmatprep.subr.bf16.mxu0 0
      %531 = vmatpush2.bf16.msra.mxu0 0
      %532 = vmatprep.subr.bf16.mxu0 0
      %533 = vmatpush2.bf16.msra.mxu0 0
      %534 = vmatprep.subr.bf16.mxu0 0
      %535 = vmatpush2.bf16.msra.mxu0 0
      %536 = vmatprep.subr.bf16.mxu0 0
      %537 = vmatpush2.bf16.msra.mxu0 0
      %538 = vmatprep.subr.bf16.mxu0 0
      %539 = vmatpush2.bf16.msra.mxu0 0
      %540 = vmatprep.subr.bf16.mxu0 0
      %541 = vmatpush2.bf16.msra.mxu0 0
      %542 = vmatprep.mubr.bf16.mxu0 0
      %543 = vmatmul.mubr.bf16.gmra.mxu0 %v499
      %v544 = vpop.f32.mrf.mxu0
      %v545 = vadd.f32 %v440, %v544
      %v546 = vpop.f32.mrf.mxu0
      %v547 = vadd.f32 %v440, %v546
      %v548 = vpop.f32.mrf.mxu0
      %v549 = vadd.f32 %v445, %v548
      %v550 = vpop.f32.mrf.mxu0
      %v551 = vadd.f32 %v445, %v550
      %552 = vmatprep.mubr.bf16.mxu0 0
      %553 = vmatmul.mubr.bf16.gmra.mxu0 %v502
      %v554 = vpop.f32.mrf.mxu0
      %v555 = vadd.f32 %v450, %v554
      %v556 = vpop.f32.mrf.mxu0
      %v557 = vadd.f32 %v450, %v556
      %v558 = vpop.f32.mrf.mxu0
      %v559 = vadd.f32 %v455, %v558
      %v560 = vpop.f32.mrf.mxu0
      %v561 = vadd.f32 %v455, %v560
      %562 = vmatprep.mubr.bf16.mxu0 0
      %563 = vmatmul.mubr.bf16.gmra.mxu0 %v505
      %v564 = vpop.f32.mrf.mxu0
      %v565 = vadd.f32 %v460, %v564
      %v566 = vpop.f32.mrf.mxu0
      %v567 = vadd.f32 %v460, %v566
      %v568 = vpop.f32.mrf.mxu0
      %v569 = vadd.f32 %v465, %v568
      %v570 = vpop.f32.mrf.mxu0
      %v571 = vadd.f32 %v465, %v570
      %572 = vmatprep.mubr.bf16.mxu0 0
      %573 = vmatmul.mubr.bf16.gmra.mxu0 %v508
      %v574 = vpop.f32.mrf.mxu0
      %v575 = vadd.f32 %v470, %v574
      %v576 = vpop.f32.mrf.mxu0
      %v577 = vadd.f32 %v470, %v576
      %v578 = vpop.f32.mrf.mxu0
      %v579 = vadd.f32 %v475, %v578
      %v580 = vpop.f32.mrf.mxu0
      %v581 = vadd.f32 %v475, %v580
      %582 = vdwg.mxu0
      %v583 = vxor.u32 %v565, 2147483648
      %v584 = vxor.u32 %v567, 2147483648
      %v585 = vxor.u32 %v569, 2147483648
      %v586 = vxor.u32 %v571, 2147483648
      %v587 = vxor.u32 %v575, 2147483648
      %v588 = vxor.u32 %v577, 2147483648
      %v589 = vxor.u32 %v579, 2147483648
      %v590 = vxor.u32 %v581, 2147483648
      %v591 = vmul.f32 %v583, 1.442695
      %v592 = vpow.pop %v591
      %v593 = vmul.f32 %v584, 1.442695
      %v594 = vpow.pop %v593
      %v595 = vmul.f32 %v585, 1.442695
      %v596 = vpow.pop %v595
      %v597 = vmul.f32 %v586, 1.442695
      %v598 = vpow.pop %v597
      %v599 = vmul.f32 %v587, 1.442695
      %v600 = vpow.pop %v599
      %v601 = vmul.f32 %v588, 1.442695
      %v602 = vpow.pop %v601
      %v603 = vmul.f32 %v589, 1.442695
      %v604 = vpow.pop %v603
      %v605 = vmul.f32 %v590, 1.442695
      %v606 = vpow.pop %v605
      %v607 = vadd.f32 %v592, 1.0
      %v608 = vadd.f32 %v594, 1.0
      %v609 = vadd.f32 %v596, 1.0
      %v610 = vadd.f32 %v598, 1.0
      %v611 = vadd.f32 %v600, 1.0
      %v612 = vadd.f32 %v602, 1.0
      %v613 = vadd.f32 %v604, 1.0
      %v614 = vadd.f32 %v606, 1.0
      %v615 = vrcp.pop %v607
      %v616 = vmul.f32 1.0, %v615
      %v617 = vrcp.pop %v608
      %v618 = vmul.f32 1.0, %v617
      %v619 = vrcp.pop %v609
      %v620 = vmul.f32 1.0, %v619
      %v621 = vrcp.pop %v610
      %v622 = vmul.f32 1.0, %v621
      %v623 = vrcp.pop %v611
      %v624 = vmul.f32 1.0, %v623
      %v625 = vrcp.pop %v612
      %v626 = vmul.f32 1.0, %v625
      %v627 = vrcp.pop %v613
      %v628 = vmul.f32 1.0, %v627
      %v629 = vrcp.pop %v614
      %v630 = vmul.f32 1.0, %v629
      %v631 = vmul.f32 %v545, %v616
      %v632 = vmul.f32 %v547, %v618
      %v633 = vmul.f32 %v549, %v620
      %v634 = vmul.f32 %v551, %v622
      %v635 = vmul.f32 %v555, %v624
      %v636 = vmul.f32 %v557, %v626
      %v637 = vmul.f32 %v559, %v628
      %v638 = vmul.f32 %v561, %v630
      %v639 = vadd.f32 %v90, %v631
      %v640 = vadd.f32 %v91, %v632
      %v641 = vadd.f32 %v92, %v633
      %v642 = vadd.f32 %v93, %v634
      %v643 = vadd.f32 %v94, %v635
      %v644 = vadd.f32 %v95, %v636
      %v645 = vadd.f32 %v96, %v637
      %v646 = vadd.f32 %v97, %v638
      %v647 = vpack.c.bf16 %v641, %v639
      %v648 = vpack.c.bf16 %v642, %v640
      %v649 = vpack.c.bf16 %v645, %v643
      %v650 = vpack.c.bf16 %v646, %v644
      %v655 = vunpack.c.l.b16 %v647
      %v656 = vunpack.c.l.b16 %v648
      %v657 = vunpack.c.h.b16 %v647
      %v658 = vunpack.c.h.b16 %v648
      %v659 = vunpack.c.l.b16 %v649
      %v660 = vunpack.c.l.b16 %v650
      %v661 = vunpack.c.h.b16 %v649
      %v662 = vunpack.c.h.b16 %v650
      %v663 = vpack.c.b16 %v656, %v655
      %v664 = vpack.c.b16 %v658, %v657
      %v665 = vpack.c.b16 %v660, %v659
      %v666 = vpack.c.b16 %v662, %v661
      %s671 = smul.addr %s83, 4
      %s672 = scalar_lea.vmem [#allocation7], %s671
      %673 = vst [vmem:[%s672] sm:$0xff] %v663
      %674 = vst [vmem:[%s672 + $0x8] sm:$0xff] %v664
      %675 = vst [vmem:[%s672 + $0x10] sm:$0xff] %v665
      %676 = vst [vmem:[%s672 + $0x18] sm:$0xff] %v666
    $region38: #{tpu_custom_call.1} parent=1 // loop_footer
      %s82 = sadd.s32 1, %s78
    $region39: #{tpu_custom_call.1} parent=1 // loop_footer_branch
      %77 = sbr.rel target = $region35
    $region40: #{tpu_custom_call.1} parent=1 // loop_exit
      _
    // Predicated region
    $region41: #{tpu_custom_call.1} parent=1 // pred_check
      _
    $region42: #{tpu_custom_call.1} parent=1 // pred_check_branch
      %678 = sbr.rel (0) target = $region44
    $region43: #{tpu_custom_call.1} parent=1 // pred_region
      %s680 = ssub.s32 1024, 1024
      %681 = vsyncadd [#allocation4], %s680
      %s682 = sshll.u32 [#allocation7], 4
      %s683 = int_to_ptr.vmem [resolvable:$true] %s682
      %688 = dma.vmem_to_hbm [thread:$0]  %s683, 1024, %s6, [#allocation4], 128, 128, 8
    $region44: #{tpu_custom_call.1} parent=1 // pred_fallthru
      _
    // Predicated region
    $region45: #{tpu_custom_call.1} parent=1 // pred_check
      _
    $region46: #{tpu_custom_call.1} parent=1 // pred_check_branch
      %690 = sbr.rel (0) target = $region48
    $region47: #{tpu_custom_call.1} parent=1 // pred_region
      %691 = dma.done [#allocation4], 1024
    $region48: #{tpu_custom_call.1} parent=1 // pred_fallthru
      _
    %692 = vsyncpa [#allocation3], 1
    %693 = vsyncpa [#allocation6], 1
    %694 = vsyncpa [#allocation4], 1

</llo_original>
